<compile_context>
chip_gen: v7x
topology: tpu7x:2x2x1
jax: 0.10.0
libtpu: 0.0.40
codegen_flags: <defaults>
</compile_context>

<pallas_src>
import functools

import jax
import jax.numpy as jnp
from jax import lax
from jax.experimental import pallas as pl
from jax.experimental.pallas import tpu as pltpu


def _ce_kernel(x_ref, t_ref, o_ref, *, n_rows, num_classes, tile_b,
               tiles_per_par, hard):
    p = pl.program_id(0)      # parallel axis (megacore split)
    i = pl.program_id(1)      # reduction axis over batch tiles

    @pl.when(i == 0)
    def _():
        o_ref[...] = jnp.zeros_like(o_ref)

    x = x_ref[...].astype(jnp.float32)                       # (tile_b, C)

    if hard:
        labels = t_ref[...]                                   # (tile_b, 1) int32
        # For a one-hot row, sum_c(t) is 1 iff the label is a valid class id.
        # Cheap (tile_b,1) validity check instead of building and reducing the
        # full one-hot (preserves ignore/out-of-range label behaviour).
        sum_t = ((labels >= 0) & (labels < num_classes)).astype(jnp.float32)
        col = lax.broadcasted_iota(jnp.int32, x.shape, 1)     # (tile_b, C)
        sum_tx = jnp.sum(jnp.where(col == labels, x, 0.0),
                         axis=-1, keepdims=True)              # (tile_b, 1)
    else:
        t = t_ref[...].astype(jnp.float32)                    # (tile_b, C)
        sum_t = jnp.sum(t, axis=-1, keepdims=True)            # (tile_b, 1)
        sum_tx = jnp.sum(t * x, axis=-1, keepdims=True)       # (tile_b, 1)

    # numerically stable logsumexp over the class axis
    m = jnp.max(x, axis=-1, keepdims=True)
    lse = m + jnp.log(jnp.sum(jnp.exp(x - m), axis=-1, keepdims=True))

    # sum_c(-t * (x - lse)) == sum_c(t) * lse - sum_c(t * x)
    per_row = sum_t * lse - sum_tx                             # (tile_b, 1)

    # Mask rows past the true batch (partial boundary blocks).  jnp.where is a
    # select, so garbage/inf in masked rows cannot leak into the result.
    row_start = (p * tiles_per_par + i) * tile_b
    row_ids = row_start + lax.broadcasted_iota(jnp.int32, (tile_b, 1), 0)
    per_row = jnp.where(row_ids < n_rows, per_row, 0.0)

    # Collapse the tile to a single scalar and accumulate into the tiny
    # per-core resident output block (avoids a (tile_b,1) accumulator's
    # load/store traffic every step).
    tile_sum = jnp.sum(per_row, axis=0, keepdims=True)         # (1, 1)
    o_ref[...] += tile_sum[None]                               # (1, 1, 1)


def cutmix_cross_entropy_loss(logits, target, size_average=True, tile_b=None):
    """JAX/Pallas equivalent of CutMixCrossEntropyLoss.forward."""
    N, C = logits.shape
    # 1-D target => hard integer class ids (the torch module one-hots it).
    hard = target.ndim == 1

    x_isz = jnp.dtype(logits.dtype).itemsize
    if hard:
        tgt = target.astype(jnp.int32).reshape(N, 1)
        t_isz = 4
    else:
        assert target.shape == (N, C), "soft target must be (N, C)"
        tgt = target
        t_isz = jnp.dtype(target.dtype).itemsize

    lane = 128
    c_pad = ((C + lane - 1) // lane) * lane
    # Sublane quantum for the narrowest streamed dtype (f32 -> 8, bf16 -> 16).
    quantum = max(8, 32 // min(x_isz, t_isz))

    # Bytes per batch row, both as streamed from HBM and as laid out in VMEM
    # (lane-padded to 128; hard labels occupy a full lane-width per row).
    hbm_row = C * x_isz + (4 if hard else C * t_isz)
    vmem_row = c_pad * x_isz + (lane * 4 if hard else c_pad * t_isz)

    if tile_b is None:
        hbm_budget = 2 * 1024 * 1024    # ~2 MiB streamed per grid step
        vmem_budget = 4 * 1024 * 1024   # <=4 MiB lane-padded per block pair
        tile_b = min(hbm_budget // hbm_row, vmem_budget // vmem_row)
    tile_b = int(tile_b)
    tile_b = max(quantum, (tile_b // quantum) * quantum)
    tile_b = min(tile_b, ((N + quantum - 1) // quantum) * quantum)

    if N < tile_b:
        # Tiny batch: pad rows so the single block fits inside the array.
        # Padded rows are masked out in-kernel, so zeros are safe here.
        pad = tile_b - N
        logits = jnp.pad(logits, ((0, pad), (0, 0)))
        tgt = jnp.pad(tgt, ((0, pad), (0, 0)))

    arr_rows = logits.shape[0]
    n_blocks = (arr_rows + tile_b - 1) // tile_b
    # 2-way split (v7x's two TensorCores) only when it divides evenly so no
    # block is ever streamed twice; otherwise a single serial pass.
    n_par = 2 if (n_blocks >= 2 and n_blocks % 2 == 0) else 1
    tiles_per_par = n_blocks // n_par

    def in_map(p, i):
        return (p * tiles_per_par + i, 0)

    kernel = functools.partial(
        _ce_kernel, n_rows=N, num_classes=C, tile_b=tile_b,
        tiles_per_par=tiles_per_par, hard=hard)

    t_block = (tile_b, 1) if hard else (tile_b, C)

    # VMEM request from the actual footprint: double-buffered streamed blocks
    # + f32 working set (upcast/exp/product temporaries) + slack; capped at
    # 32 MiB to stay comfortably inside v7x's 64 MiB/TC VMEM.
    x_blk_v = tile_b * c_pad * x_isz
    t_blk_v = tile_b * (lane * 4 if hard else c_pad * t_isz)
    need = 2 * (x_blk_v + t_blk_v) + 5 * tile_b * c_pad * 4 + (2 << 20)
    vmem_limit = int(min(max(need, 8 << 20), 32 << 20))

    partials = pl.pallas_call(
        kernel,
        out_shape=jax.ShapeDtypeStruct((n_par, 1, 1), jnp.float32),
        grid_spec=pltpu.PrefetchScalarGridSpec(
            num_scalar_prefetch=0,
            grid=(n_par, tiles_per_par),
            in_specs=[
                pl.BlockSpec((tile_b, C), in_map),   # logits tile (native dtype)
                pl.BlockSpec(t_block, in_map),       # soft targets or labels
            ],
            out_specs=pl.BlockSpec((1, 1, 1), lambda p, i: (p, 0, 0)),
        ),
        compiler_params=pltpu.CompilerParams(
            dimension_semantics=("parallel", "arbitrary"),
            vmem_limit_bytes=vmem_limit,
        ),
    )(logits, tgt)

    total = jnp.sum(partials)
    if size_average:
        return total / N
    return total


def _reference_loss(x, t, size_average=True):
    x = x.astype(jnp.float32)
    t = t.astype(jnp.float32)
    ls = jax.nn.log_softmax(x, axis=1)
    per_row = jnp.sum(-t * ls, axis=1)
    return jnp.mean(per_row) if size_average else jnp.sum(per_row)


if __name__ == "__main__":
    key = jax.random.PRNGKey(0)
    k1, k2, k3, k4, k5 = jax.random.split(key, 5)

    # 1) soft targets, mean
    N1, C1 = 16, 128
    x1 = jax.random.normal(k1, (N1, C1), dtype=jnp.float32)
    t1 = jax.nn.softmax(jax.random.normal(k2, (N1, C1), dtype=jnp.float32), -1)
    got1 = cutmix_cross_entropy_loss(x1, t1, size_average=True)
    ref1 = _reference_loss(x1, t1, True)

    # 2) hard integer labels (one-hot built in-kernel), sum
    lab2 = jax.random.randint(k3, (N1,), 0, C1)
    got2 = cutmix_cross_entropy_loss(x1, lab2, size_average=False)
    ref2 = _reference_loss(x1, jax.nn.one_hot(lab2, C1, dtype=jnp.float32), False)

    # 3) ragged shapes + bf16 inputs (edge masking, in-kernel upcast)
    N3, C3 = 13, 96
    x3 = jax.random.normal(k4, (N3, C3), dtype=jnp.bfloat16)
    t3 = jax.nn.softmax(
        jax.random.normal(k5, (N3, C3), dtype=jnp.float32), -1
    ).astype(jnp.bfloat16)
    got3 = cutmix_cross_entropy_loss(x3, t3, size_average=True)
    ref3 = _reference_loss(x3, t3, True)

    # 4) multi-tile grid exercising the even 2-way parallel split + a partial
    #    boundary block (forced small tile)
    N4, C4 = 56, 128
    x4 = jax.random.normal(k1, (N4, C4), dtype=jnp.float32)
    lab4 = jax.random.randint(k2, (N4,), 0, C4)
    got4 = cutmix_cross_entropy_loss(x4, lab4, size_average=True, tile_b=16)
    ref4 = _reference_loss(x4, jax.nn.one_hot(lab4, C4, dtype=jnp.float32), True)

    # 5) odd block count -> single serial pass (no duplicate block reads)
    N5, C5 = 40, 128
    x5 = jax.random.normal(k3, (N5, C5), dtype=jnp.float32)
    t5 = jax.nn.softmax(jax.random.normal(k4, (N5, C5), dtype=jnp.float32), -1)
    got5 = cutmix_cross_entropy_loss(x5, t5, size_average=True, tile_b=16)
    ref5 = _reference_loss(x5, t5, True)

    jax.block_until_ready((got1, got2, got3, got4, got5))

    assert jnp.allclose(got1, ref1, rtol=1e-5, atol=1e-5), (got1, ref1)
    assert jnp.allclose(got2, ref2, rtol=1e-5, atol=1e-5), (got2, ref2)
    assert jnp.allclose(got3, ref3, rtol=1e-4, atol=1e-4), (got3, ref3)
    assert jnp.allclose(got4, ref4, rtol=1e-5, atol=1e-5), (got4, ref4)
    assert jnp.allclose(got5, ref5, rtol=1e-5, atol=1e-5), (got5, ref5)

    print("KERNEL_OK")
</pallas_src>

<mosaic_0001>
module attributes {stable_mosaic.version = 11 : i64} {
  func.func @_ce_kernel(%arg0: i32, %arg1: i32, %arg2: memref<16x128xf32, #tpu.memory_space<vmem>>, %arg3: memref<16x128xf32, #tpu.memory_space<vmem>>, %arg4: memref<1x1x1xf32, #tpu.memory_space<vmem>>) attributes {dimension_semantics = [#tpu.dimension_semantics<parallel>, #tpu.dimension_semantics<arbitrary>], iteration_bounds = array<i64: 1, 1>, scalar_prefetch = 0 : i64, scratch_operands = 0 : i64, tpu.core_type = #tpu.core_type<tc>, window_params = [{transform_indices = @transform_0, window_bounds = array<i64: 16, 128>}, {transform_indices = @transform_1, window_bounds = array<i64: 16, 128>}, {transform_indices = @transform_2, window_bounds = array<i64: 1, 1, 1>}]} {
    %c0_i32 = arith.constant 0 : i32
    %0 = arith.cmpi eq, %arg1, %c0_i32 : i32
    %1 = arith.extui %0 : i1 to i32
    %c0_i32_0 = arith.constant 0 : i32
    %2 = arith.cmpi ne, %1, %c0_i32_0 : i32
    scf.if %2 {
      %cst_16 = arith.constant 0.000000e+00 : f32
      %37 = vector.broadcast %cst_16 : f32 to vector<1x1x1xf32>
      %c0_17 = arith.constant 0 : index
      %c0_18 = arith.constant 0 : index
      %c0_19 = arith.constant 0 : index
      %38 = vector.load %arg4[%c0_17, %c0_18, %c0_19] : memref<1x1x1xf32, #tpu.memory_space<vmem>>, vector<1x1x1xf32>
      tpu.vector_store %arg4[%c0_17, %c0_18, %c0_19], %37 {strides = array<i32>} : memref<1x1x1xf32, #tpu.memory_space<vmem>>, vector<1x1x1xf32>,
    } else {
    }
    %c0 = arith.constant 0 : index
    %c0_1 = arith.constant 0 : index
    %3 = vector.load %arg2[%c0, %c0_1] : memref<16x128xf32, #tpu.memory_space<vmem>>, vector<16x128xf32>
    %c0_2 = arith.constant 0 : index
    %c0_3 = arith.constant 0 : index
    %4 = vector.load %arg3[%c0_2, %c0_3] : memref<16x128xf32, #tpu.memory_space<vmem>>, vector<16x128xf32>
    %cst = arith.constant dense<0.000000e+00> : vector<16xf32>
    %5 = vector.multi_reduction <add>, %4, %cst [1] : vector<16x128xf32> to vector<16xf32>
    %6 = vector.shape_cast %5 : vector<16xf32> to vector<16x1xf32>
    %7 = arith.mulf %4, %3 : vector<16x128xf32>
    %cst_4 = arith.constant dense<0.000000e+00> : vector<16xf32>
    %8 = vector.multi_reduction <add>, %7, %cst_4 [1] : vector<16x128xf32> to vector<16xf32>
    %9 = vector.shape_cast %8 : vector<16xf32> to vector<16x1xf32>
    %cst_5 = arith.constant dense<0xFF800000> : vector<16xf32>
    %10 = vector.multi_reduction <maximumf>, %3, %cst_5 [1] : vector<16x128xf32> to vector<16xf32>
    %11 = vector.shape_cast %10 : vector<16xf32> to vector<16x1xf32>
    %12 = vector.broadcast %11 : vector<16x1xf32> to vector<16x128xf32>
    %13 = arith.subf %3, %12 : vector<16x128xf32>
    %14 = math.exp %13 : vector<16x128xf32>
    %cst_6 = arith.constant dense<0.000000e+00> : vector<16xf32>
    %15 = vector.multi_reduction <add>, %14, %cst_6 [1] : vector<16x128xf32> to vector<16xf32>
    %16 = vector.shape_cast %15 : vector<16xf32> to vector<16x1xf32>
    %17 = math.log %16 : vector<16x1xf32>
    %18 = arith.addf %11, %17 : vector<16x1xf32>
    %19 = arith.mulf %6, %18 : vector<16x1xf32>
    %20 = arith.subf %19, %9 : vector<16x1xf32>
    %c1_i32 = arith.constant 1 : i32
    %21 = arith.muli %arg0, %c1_i32 : i32
    %22 = arith.addi %21, %arg1 : i32
    %c16_i32 = arith.constant 16 : i32
    %23 = arith.muli %22, %c16_i32 : i32
    %24 = tpu.iota {dimensions = array<i32: 0>} : vector<16x1xi32>
    %25 = vector.broadcast %23 : i32 to vector<16x1xi32>
    %26 = arith.addi %25, %24 : vector<16x1xi32>
    %c16_i32_7 = arith.constant 16 : i32
    %27 = vector.broadcast %c16_i32_7 : i32 to vector<16x1xi32>
    %28 = arith.cmpi slt, %26, %27 : vector<16x1xi32>
    %cst_8 = arith.constant 0.000000e+00 : f32
    %29 = vector.broadcast %cst_8 : f32 to vector<16x1xf32>
    %30 = arith.select %28, %20, %29 : vector<16x1xi1>, vector<16x1xf32>
    %cst_9 = arith.constant dense<0.000000e+00> : vector<1xf32>
    %31 = vector.multi_reduction <add>, %30, %cst_9 [0] : vector<16x1xf32> to vector<1xf32>
    %32 = vector.shape_cast %31 : vector<1xf32> to vector<1x1xf32>
    %c0_10 = arith.constant 0 : index
    %c0_11 = arith.constant 0 : index
    %c0_12 = arith.constant 0 : index
    %33 = vector.load %arg4[%c0_10, %c0_11, %c0_12] : memref<1x1x1xf32, #tpu.memory_space<vmem>>, vector<1x1x1xf32>
    %34 = vector.shape_cast %32 : vector<1x1xf32> to vector<1x1x1xf32>
    %35 = arith.addf %33, %34 : vector<1x1x1xf32>
    %c0_13 = arith.constant 0 : index
    %c0_14 = arith.constant 0 : index
    %c0_15 = arith.constant 0 : index
    %36 = vector.load %arg4[%c0_13, %c0_14, %c0_15] : memref<1x1x1xf32, #tpu.memory_space<vmem>>, vector<1x1x1xf32>
    tpu.vector_store %arg4[%c0_13, %c0_14, %c0_15], %35 {strides = array<i32>} : memref<1x1x1xf32, #tpu.memory_space<vmem>>, vector<1x1x1xf32>,
    return
  }
  func.func @transform_0(%arg0: i32, %arg1: i32) -> (i32, i32) {
    %c1_i32 = arith.constant 1 : i32
    %0 = arith.muli %arg0, %c1_i32 : i32
    %1 = arith.addi %0, %arg1 : i32
    %c0_i32 = arith.constant 0 : i32
    %c0_i32_0 = arith.constant 0 : i32
    return %1, %c0_i32 : i32, i32
  }
  func.func @transform_1(%arg0: i32, %arg1: i32) -> (i32, i32) {
    %c1_i32 = arith.constant 1 : i32
    %0 = arith.muli %arg0, %c1_i32 : i32
    %1 = arith.addi %0, %arg1 : i32
    %c0_i32 = arith.constant 0 : i32
    %c0_i32_0 = arith.constant 0 : i32
    return %1, %c0_i32 : i32, i32
  }
  func.func @transform_2(%arg0: i32, %arg1: i32) -> (i32, i32, i32) {
    %c0_i32 = arith.constant 0 : i32
    %c0_i32_0 = arith.constant 0 : i32
    %c0_i32_1 = arith.constant 0 : i32
    return %arg0, %c0_i32, %c0_i32_0 : i32, i32, i32
  }
}

</mosaic_0001>

<llo_original>
// kernel: tpu_custom_call.1
$region0: #{tpu_custom_call.1}
  #allocation0 [shape = 'u32[]', space=smem, size = 0x4, offset = 0x4, fixed_abs, tag = 'smem constant byte address 0x4 - core index']
  #allocation1 [shape = 'u32[144,128]{1,0:T(1,128)}', space=vmem, size = 0x12000, scoped, tag = 'internal scratch']
  %s0 = inlined_call_operand.hbm [shape: f32[16,128], index: 0, kind: input, shape index: {}]
  %s1 = inlined_call_operand.hbm [shape: f32[16,128], index: 1, kind: input, shape index: {}]
  %s2 = inlined_call_operand.hbm [shape: f32[1,1,1], index: 2, kind: output, shape index: {}]
  %s3 = sld [smem:[#allocation0]]
  $region30: #{tpu_custom_call.1} parent=0
    _
  %s5 = ssub.s32 1, %s3
  %s6 = scalar_select 0, %s5, %s3
  $region1: #{tpu_custom_call.1} parent=0
    #allocation2 [shape = 'u8[8192]{0}', space=vmem, size = 0x2000, scoped, tag = 'input window, operand 0, single buffered']
    #allocation3 [shape = 's32[1]{0}', space=sflag, size = 0x4, scoped, tag = 'scoped memory for tpu_custom_call.1']
    #allocation4 [shape = 's32[1]{0}', space=sflag, size = 0x4, scoped, tag = 'scoped memory for tpu_custom_call.1']
    #allocation5 [shape = 'u8[8192]{0}', space=vmem, size = 0x2000, scoped, tag = 'input window, operand 1, single buffered']
    #allocation6 [shape = 's32[1]{0}', space=sflag, size = 0x4, scoped, tag = 'scoped memory for tpu_custom_call.1']
    #allocation7 [shape = 'u8[512]{0}', space=vmem, size = 0x400, scoped, tag = 'output window, operand 0, single buffered']
    %7 = vsyncpa [#allocation3], 0
    %8 = vsyncpa [#allocation6], 0
    %9 = vsyncpa [#allocation4], 0
    // Predicated region
    $region2: #{tpu_custom_call.1} parent=1 // pred_check
      _
    $region3: #{tpu_custom_call.1} parent=1 // pred_check_branch
      %11 = sbr.rel (0) target = $region5
    $region4: #{tpu_custom_call.1} parent=1 // pred_region
      %s12 = sadd.s32 0, 0
      %s13 = smul.u32 2, %s12
      %s15 = ssub.s32 256, 256
      %16 = vsyncadd [#allocation3], %s15
      %s17 = smul.addr %s13, 128
      %s18 = scalar_lea.hbm %s0, %s17
      %s19 = sshll.u32 [#allocation2], 4
      %s20 = int_to_ptr.vmem [resolvable:$true] %s19
      %25 = dma.hbm_to_vmem [thread:$0]  %s18, 256, %s20, [#allocation3], 128, 128, 8
    $region5: #{tpu_custom_call.1} parent=1 // pred_fallthru
      _
    // Predicated region
    $region6: #{tpu_custom_call.1} parent=1 // pred_check
      _
    $region7: #{tpu_custom_call.1} parent=1 // pred_check_branch
      %27 = sbr.rel (0) target = $region9
    $region8: #{tpu_custom_call.1} parent=1 // pred_region
      %s28 = sadd.s32 0, 0
      %s29 = smul.u32 2, %s28
      %s31 = ssub.s32 256, 256
      %32 = vsyncadd [#allocation6], %s31
      %s33 = smul.addr %s29, 128
      %s34 = scalar_lea.hbm %s1, %s33
      %s35 = sshll.u32 [#allocation5], 4
      %s36 = int_to_ptr.vmem [resolvable:$true] %s35
      %41 = dma.hbm_to_vmem [thread:$0]  %s34, 256, %s36, [#allocation6], 128, 128, 8
    $region9: #{tpu_custom_call.1} parent=1 // pred_fallthru
      _
    // Predicated region
    $region10: #{tpu_custom_call.1} parent=1 // pred_check
      _
    $region11: #{tpu_custom_call.1} parent=1 // pred_check_branch
      %43 = sbr.rel (0) target = $region13
    $region12: #{tpu_custom_call.1} parent=1 // pred_region
      %44 = dma.done [#allocation3], 256
    $region13: #{tpu_custom_call.1} parent=1 // pred_fallthru
      _
    // Predicated region
    $region14: #{tpu_custom_call.1} parent=1 // pred_check
      _
    $region15: #{tpu_custom_call.1} parent=1 // pred_check_branch
      %46 = sbr.rel (0) target = $region17
    $region16: #{tpu_custom_call.1} parent=1 // pred_region
      %47 = dma.done [#allocation6], 256
    $region17: #{tpu_custom_call.1} parent=1 // pred_fallthru
      _
    %s48 = sadd.s32 0, 0
    %s49 = smul.u32 2, %s48
    %s50 = sadd.s32 0, 0
    %s51 = smul.u32 2, %s50
    %p52 = scmp.eq.s32.totalorder 0, 0
    // Predicated region
    $region18: #{tpu_custom_call.1} parent=1 // pred_check
      %p53 = pneg %p52
    $region19: #{tpu_custom_call.1} parent=1 // pred_check_branch
      %55 = sbr.rel (%p53) target = $region21
    $region20: #{tpu_custom_call.1} parent=1 // pred_region
      %vm56 = vcmask 0
      %57 = vst.msk [vmem:[#allocation7] sm:$0x1] %vm56, 0.0
    $region21: #{tpu_custom_call.1} parent=1 // pred_fallthru
      _
    %v58 = vld [vmem:[#allocation2] sm:$0xff]
    %v59 = vld [vmem:[#allocation2 + $0x8] sm:$0xff]
    %v60 = vld [vmem:[#allocation5] sm:$0xff]
    %v61 = vld [vmem:[#allocation5 + $0x8] sm:$0xff]
    %62 = vadd.xlane.f32.xlu0 %v60
    %v63 = vpop.xlane.xlu0 %62
    %64 = vadd.xlane.f32.xlu0 %v61
    %v65 = vpop.xlane.xlu0 %64
    %v66 = vmul.f32 %v60, %v58
    %v67 = vmul.f32 %v61, %v59
    %68 = vadd.xlane.f32.xlu0 %v66
    %v69 = vpop.xlane.xlu0 %68
    %70 = vadd.xlane.f32.xlu0 %v67
    %v71 = vpop.xlane.xlu0 %70
    %72 = vmax.xlane.f32.xlu0 %v58
    %v73 = vpop.xlane.xlu0 %72
    %74 = vmax.xlane.f32.xlu0 %v59
    %v75 = vpop.xlane.xlu0 %74
    %v76 = vsub.f32 %v58, %v73
    %v77 = vsub.f32 %v59, %v75
    %v78 = vmul.f32 %v76, 1.442695
    %v79 = vpow.pop %v78
    %v80 = vmul.f32 %v77, 1.442695
    %v81 = vpow.pop %v80
    %82 = vadd.xlane.f32.xlu0 %v79
    %v83 = vpop.xlane.xlu0 %82
    %84 = vadd.xlane.f32.xlu0 %v81
    %v85 = vpop.xlane.xlu0 %84
    %v86 = vlog2.pop %v83
    %v87 = vmul.f32 %v86, 0.6931472
    %v88 = vlog2.pop %v85
    %v89 = vmul.f32 %v88, 0.6931472
    %v90 = vadd.f32 %v73, %v87
    %v91 = vadd.f32 %v75, %v89
    %v92 = vmul.f32 %v63, %v90
    %v93 = vmul.f32 %v65, %v91
    %v94 = vsub.f32 %v92, %v69
    %v95 = vsub.f32 %v93, %v71
    %s96 = sadd.s32 0, 0
    %s97 = smul.u32 %s96, 16
    %v98 = vlaneseq
    %v99 = vshrl.u32 %v98, 7
    %v100 = vadd.s32 %v99, 8
    %v101 = vstv %s97
    %v102 = vadd.s32 %v101, %v99
    %v103 = vadd.s32 %v101, %v100
    %vm104 = vcmp.lt.s32.totalorder %v102, 16
    %vm105 = vcmp.lt.s32.totalorder %v103, 16
    %v106 = vsel %vm104, %v94, 0.0
    %v107 = vsel %vm105, %v95, 0.0
    %v108 = vadd.f32 %v106, %v107
    %v109 = vrot.slane %v108, 4
    %v110 = vadd.f32 %v108, %v109
    %v111 = vrot.slane %v110, 2
    %v112 = vadd.f32 %v110, %v111
    %v113 = vrot.slane %v112, 1
    %v114 = vadd.f32 %v112, %v113
    %v115 = vld [vmem:[#allocation7] sm:$0x1]
    %v116 = vadd.f32 %v115, %v114
    %vm117 = vcmask 0
    %118 = vst.msk [vmem:[#allocation7] sm:$0x1] %vm117, %v116
    // Predicated region
    $region22: #{tpu_custom_call.1} parent=1 // pred_check
      _
    $region23: #{tpu_custom_call.1} parent=1 // pred_check_branch
      %120 = sbr.rel (0) target = $region25
    $region24: #{tpu_custom_call.1} parent=1 // pred_region
      %s122 = ssub.s32 16, 16
      %123 = vsyncadd [#allocation4], %s122
      %s125 = sshll.u32 [#allocation7], 4
      %s126 = int_to_ptr.vmem [resolvable:$true] %s125
      %128 = dma.vmem_to_hbm [thread:$0]  %s126, 16, %s2, [#allocation4]
    $region25: #{tpu_custom_call.1} parent=1 // pred_fallthru
      _
    // Predicated region
    $region26: #{tpu_custom_call.1} parent=1 // pred_check
      _
    $region27: #{tpu_custom_call.1} parent=1 // pred_check_branch
      %130 = sbr.rel (0) target = $region29
    $region28: #{tpu_custom_call.1} parent=1 // pred_region
      %131 = dma.done [#allocation4], 16
    $region29: #{tpu_custom_call.1} parent=1 // pred_fallthru
      _
    %132 = vsyncpa [#allocation3], 1
    %133 = vsyncpa [#allocation6], 1
    %134 = vsyncpa [#allocation4], 1

</llo_original>
